<compile_context>
chip_gen: v5e
topology: v5e:2x2
jax: 0.10.0
libtpu: 0.0.40
codegen_flags: <defaults>
</compile_context>

<pallas_src>
import numpy as np
import jax
import jax.numpy as jnp
from jax.experimental import pallas as pl
from jax.experimental.pallas import tpu as pltpu


# ----------------------------------------------------------------------------
# Deterministic parameter construction (mirrors the PyTorch __init__).
# ----------------------------------------------------------------------------
def _grid_coords(size):
    idx = np.arange(size * size)
    return idx // size, idx % size  # (row, col) for each flattened grid node


def self_matrix(size):
    return np.eye(size * size, dtype=np.float64)


def nn_matrix(size):
    r, c = _grid_coords(size)
    dr = np.abs(r[:, None] - r[None, :])
    dc = np.abs(c[:, None] - c[None, :])
    return ((dr + dc) == 1).astype(np.float64)  # 4-connected neighbors


def nnn_matrix(size):
    r, c = _grid_coords(size)
    dr = np.abs(r[:, None] - r[None, :])
    dc = np.abs(c[:, None] - c[None, :])
    return ((dr == 1) & (dc == 1)).astype(np.float64)  # diagonal neighbors


def transform_adjacency_matrix(adj, add_self_loops, mode):
    a = np.array(adj, dtype=np.float64)
    if add_self_loops:
        a = a + np.eye(a.shape[0])
    if mode == "sum":
        out = a
    elif mode == "avg+1":
        out = a / (a.sum(axis=-1, keepdims=True) + 1.0)
    else:
        raise ValueError(mode)
    return out.astype(np.float32)


def make_adj_templates(size):
    """Stacked (3, N, N) f32 templates: [center(=I), nn, nnn].

    GraphMaskConvolution always uses average_graph_connections=False -> 'sum'
    and add_self_loops=False, so templates[0] is exactly the identity."""
    mode = "sum"
    center = transform_adjacency_matrix(self_matrix(size), False, mode)
    nn_adj = transform_adjacency_matrix(nn_matrix(size), False, mode)
    nnn_adj = transform_adjacency_matrix(nnn_matrix(size), False, mode)
    return jnp.asarray(np.stack([center, nn_adj, nnn_adj], axis=0))


# ----------------------------------------------------------------------------
# Pallas kernels
#   res[b] = x[b]*f0  +  [A_nn | A_nnn] @ stack(x[b]*f1, x[b]*f2)
# ----------------------------------------------------------------------------
def _make_gmc_kernel(num_extra, block_batch):
    def kernel(x_ref, adj_ref, f_ref, o_ref):
        # x_ref:   (BB, N, D) f32   activation slab for BB batch elements
        # adj_ref: (N, num_extra*N) bf16   [nn | nnn] concatenated, VMEM-resident
        # f_ref:   (T, D) f32       per-template, per-channel factors
        # o_ref:   (BB, N, D)
        adj = adj_ref[...]  # load once; reused across the batch unroll
        for b in range(block_batch):  # static unroll
            xb = x_ref[b]  # (N, D) f32
            # Center template == identity: factors[0]*(I @ x) == x*factors[0] (VPU).
            acc = xb * f_ref[0:1, :]  # (N, D) f32
            # One fused MXU matmul for the nn/nnn terms:
            #   factors[t]*(A_t @ x) == A_t @ (x*factors[t])  (scale is per-d only)
            rhs = jnp.concatenate(
                [(xb * f_ref[t + 1:t + 2, :]).astype(jnp.bfloat16)
                 for t in range(num_extra)],
                axis=0)  # (num_extra*N, D) bf16
            acc = acc + jnp.dot(adj, rhs, preferred_element_type=jnp.float32)
            o_ref[b] = acc.astype(o_ref.dtype)

    return kernel


def _make_scale_only_kernel(block_batch):
    # graph_layer outside {symm_nn, symm_nnn}: only the (identity) center term.
    def kernel(x_ref, f_ref, o_ref):
        for b in range(block_batch):
            o_ref[b] = (x_ref[b] * f_ref[0:1, :]).astype(o_ref.dtype)

    return kernel


def graphmask_convolution_forward(x, adj_templates, factors,
                                  graph_layer="symm_nn", block_batch=None):
    """Forward pass of GraphMaskConvolution.

    x:             f32[B, N, D]   (N = size*size graph nodes, D = embed_dim)
    adj_templates: f32[3, N, N]   stacked [center, nn, nnn] templates
    factors:       f32[3, D]      trainable per-channel factors
    """
    B, N, D = x.shape
    if graph_layer == "symm_nnn":
        T = 3
    elif graph_layer == "symm_nn":
        T = 2
    else:  # matches the PyTorch if-structure: only the center term
        T = 1
    num_extra = T - 1
    f = factors[:T]  # (T, D)

    # Batch blocking: fatter grid steps when B is large, but keep >= 2 grid
    # steps so both v7x TensorCores get work.
    if block_batch is None:
        block_batch = B // 2 if (B % 2 == 0 and B > 2) else 1
    assert B % block_batch == 0, "B must be divisible by block_batch"
    num_blocks = B // block_batch

    itemsize = jnp.dtype(x.dtype).itemsize
    flops = 2 * B * num_extra * N * N * D + 2 * B * T * N * D
    bytes_accessed = (2 * x.size + f.size) * itemsize \
        + num_extra * N * N * 2  # bf16 adjacency
    cost = pl.CostEstimate(flops=int(flops), transcendentals=0,
                           bytes_accessed=int(bytes_accessed))
    cparams = pltpu.CompilerParams(dimension_semantics=("parallel",))

    x_spec = pl.BlockSpec((block_batch, N, D), lambda i: (i, 0, 0))
    f_spec = pl.BlockSpec((T, D), lambda i: (0, 0))
    out_spec = pl.BlockSpec((block_batch, N, D), lambda i: (i, 0, 0))

    if num_extra == 0:
        return pl.pallas_call(
            _make_scale_only_kernel(block_batch),
            out_shape=jax.ShapeDtypeStruct((B, N, D), x.dtype),
            grid=(num_blocks,),
            in_specs=[x_spec, f_spec],
            out_specs=out_spec,
            compiler_params=cparams,
            cost_estimate=cost,
        )(x, f)

    # Concatenate the nn / nnn templates along columns: (N, num_extra*N), bf16.
    # Entries are {0,1}, exactly representable in bf16.  The center (identity)
    # template is never transferred.
    adj_cat = jnp.concatenate([adj_templates[t] for t in range(1, T)],
                              axis=1).astype(jnp.bfloat16)

    return pl.pallas_call(
        _make_gmc_kernel(num_extra, block_batch),
        out_shape=jax.ShapeDtypeStruct((B, N, D), x.dtype),
        grid=(num_blocks,),
        in_specs=[
            x_spec,                                             # per-batch slab
            pl.BlockSpec((N, num_extra * N), lambda i: (0, 0)),  # adj: resident
            f_spec,                                             # factors: resident
        ],
        out_specs=out_spec,
        compiler_params=cparams,
        cost_estimate=cost,
    )(x, adj_cat, f)


# ----------------------------------------------------------------------------
# Pure-numpy reference (matches the PyTorch forward) + demo / correctness check.
# ----------------------------------------------------------------------------
def reference_forward(x, adj_templates, factors, graph_layer="symm_nn"):
    xn = np.asarray(x)
    adj = np.asarray(adj_templates)
    f = np.asarray(factors)
    res = f[0][None, None, :] * np.einsum("nm,bmd->bnd", adj[0], xn)
    if graph_layer in ("symm_nn", "symm_nnn"):
        res = res + f[1][None, None, :] * np.einsum("nm,bmd->bnd", adj[1], xn)
    if graph_layer == "symm_nnn":
        res = res + f[2][None, None, :] * np.einsum("nm,bmd->bnd", adj[2], xn)
    return res


if __name__ == "__main__":
    # Small shapes consistent with the module: grid size 8 -> N = 64 nodes,
    # embed_dim 128 (lane-dense hidden dim), batch 2.
    size = 8
    N = size * size
    embed_dim = 128
    B = 2

    key = jax.random.PRNGKey(0)
    k_x, k_f = jax.random.split(key)
    x = jax.random.normal(k_x, (B, N, embed_dim), dtype=jnp.float32)
    factors = jax.random.normal(k_f, (3, embed_dim), dtype=jnp.float32)
    adj_templates = make_adj_templates(size)
    assert adj_templates.shape == (3, N, N)
    # Identity-skip assumption: center template is exactly eye(N).
    np.testing.assert_array_equal(np.asarray(adj_templates[0]),
                                  np.eye(N, dtype=np.float32))

    for graph_layer in ("symm_nn", "symm_nnn"):
        y = graphmask_convolution_forward(x, adj_templates, factors,
                                          graph_layer=graph_layer)
        y = jax.block_until_ready(y)
        ref = reference_forward(x, adj_templates, factors,
                                graph_layer=graph_layer)
        # bf16 MXU operands (f32 accumulation) -> modest tolerance.
        np.testing.assert_allclose(np.asarray(y), ref, rtol=2e-2, atol=2e-2)

    print("KERNEL_OK")
</pallas_src>

<mosaic_0001>
module attributes {stable_mosaic.version = 11 : i64} {
  func.func @kernel(%arg0: i32, %arg1: memref<1x64x128xf32, #tpu.memory_space<vmem>>, %arg2: memref<64x64xbf16, #tpu.memory_space<vmem>>, %arg3: memref<2x128xf32, #tpu.memory_space<vmem>>, %arg4: memref<1x64x128xf32, #tpu.memory_space<vmem>>) attributes {dimension_semantics = [#tpu.dimension_semantics<parallel>], iteration_bounds = array<i64: 2>, scalar_prefetch = 0 : i64, scratch_operands = 0 : i64, tpu.core_type = #tpu.core_type<tc>, window_params = [{transform_indices = @transform_0, window_bounds = array<i64: 1, 64, 128>}, {pipeline_mode = #tpu.pipeline_mode<synchronous>, transform_indices = @transform_1, window_bounds = array<i64: 64, 64>}, {pipeline_mode = #tpu.pipeline_mode<synchronous>, transform_indices = @transform_2, window_bounds = array<i64: 2, 128>}, {transform_indices = @transform_3, window_bounds = array<i64: 1, 64, 128>}]} {
    %c0 = arith.constant 0 : index
    %c0_0 = arith.constant 0 : index
    %0 = vector.load %arg2[%c0, %c0_0] : memref<64x64xbf16, #tpu.memory_space<vmem>>, vector<64x64xbf16>
    %c0_1 = arith.constant 0 : index
    %c0_2 = arith.constant 0 : index
    %c0_3 = arith.constant 0 : index
    %1 = vector.load %arg1[%c0_1, %c0_2, %c0_3] : memref<1x64x128xf32, #tpu.memory_space<vmem>>, vector<1x64x128xf32>
    %2 = vector.shape_cast %1 : vector<1x64x128xf32> to vector<64x128xf32>
    %c0_4 = arith.constant 0 : index
    %c0_5 = arith.constant 0 : index
    %3 = vector.load %arg3[%c0_4, %c0_5] : memref<2x128xf32, #tpu.memory_space<vmem>>, vector<1x128xf32>
    %4 = vector.broadcast %3 : vector<1x128xf32> to vector<64x128xf32>
    %5 = arith.mulf %2, %4 : vector<64x128xf32>
    %c1 = arith.constant 1 : index
    %c0_6 = arith.constant 0 : index
    %6 = vector.load %arg3[%c1, %c0_6] : memref<2x128xf32, #tpu.memory_space<vmem>>, vector<1x128xf32>
    %7 = vector.broadcast %6 : vector<1x128xf32> to vector<64x128xf32>
    %8 = arith.mulf %2, %7 : vector<64x128xf32>
    %9 = arith.truncf %8 : vector<64x128xf32> to vector<64x128xbf16>
    %cst = arith.constant dense<0.000000e+00> : vector<64x128xf32>
    %10 = tpu.matmul %0, %9, %cst {dimension_numbers = #tpu.dot_dimension_numbers<[1], [0], [0], [1], [0, 0, 1, 1], [], []>} : vector<64x64xbf16>, vector<64x128xbf16>, vector<64x128xf32> -> vector<64x128xf32>
    %11 = arith.addf %5, %10 : vector<64x128xf32>
    %c0_7 = arith.constant 0 : index
    %c0_8 = arith.constant 0 : index
    %c0_9 = arith.constant 0 : index
    %12 = vector.load %arg4[%c0_7, %c0_8, %c0_9] : memref<1x64x128xf32, #tpu.memory_space<vmem>>, vector<1x64x128xf32>
    %13 = vector.shape_cast %12 : vector<1x64x128xf32> to vector<64x128xf32>
    %14 = vector.shape_cast %11 : vector<64x128xf32> to vector<1x64x128xf32>
    tpu.vector_store %arg4[%c0_7, %c0_8, %c0_9], %14 {strides = array<i32>} : memref<1x64x128xf32, #tpu.memory_space<vmem>>, vector<1x64x128xf32>,
    return
  }
  func.func @transform_0(%arg0: i32) -> (i32, i32, i32) {
    %c0_i32 = arith.constant 0 : i32
    %c0_i32_0 = arith.constant 0 : i32
    %c0_i32_1 = arith.constant 0 : i32
    return %arg0, %c0_i32, %c0_i32_0 : i32, i32, i32
  }
  func.func @transform_1(%arg0: i32) -> (i32, i32) {
    %c0_i32 = arith.constant 0 : i32
    %c0_i32_0 = arith.constant 0 : i32
    %c0_i32_1 = arith.constant 0 : i32
    return %c0_i32, %c0_i32_0 : i32, i32
  }
  func.func @transform_2(%arg0: i32) -> (i32, i32) {
    %c0_i32 = arith.constant 0 : i32
    %c0_i32_0 = arith.constant 0 : i32
    %c0_i32_1 = arith.constant 0 : i32
    return %c0_i32, %c0_i32_0 : i32, i32
  }
  func.func @transform_3(%arg0: i32) -> (i32, i32, i32) {
    %c0_i32 = arith.constant 0 : i32
    %c0_i32_0 = arith.constant 0 : i32
    %c0_i32_1 = arith.constant 0 : i32
    return %arg0, %c0_i32, %c0_i32_0 : i32, i32, i32
  }
}

</mosaic_0001>

<llo_original>
// kernel: tpu_custom_call.1
$region0: #{tpu_custom_call.1}
  #allocation0 [shape = 'u32[]', space=smem, size = 0x4, offset = 0x4, fixed_abs, tag = 'smem constant byte address 0x4 - core index']
  #allocation1 [shape = 'u32[72,128]{1,0:T(1,128)}', space=vmem, size = 0x9000, scoped, tag = 'internal scratch']
  %s0 = inlined_call_operand.hbm [shape: f32[2,64,128], index: 0, kind: input, shape index: {}]
  %s1 = inlined_call_operand.hbm [shape: bf16[64,64], index: 1, kind: input, shape index: {}]
  %s2 = inlined_call_operand.hbm [shape: f32[2,128], index: 2, kind: input, shape index: {}]
  %s3 = inlined_call_operand.hbm [shape: f32[2,64,128], index: 3, kind: output, shape index: {}]
  %s4 = sld [smem:[#allocation0]]
  $region57: #{tpu_custom_call.1} parent=0
    _
  %s6 = ssub.s32 1, %s4
  %s7 = scalar_select 0, %s6, %s4
  $region1: #{tpu_custom_call.1} parent=0
    #allocation2 [shape = 'u8[65536]{0}', space=vmem, size = 0x10000, scoped, tag = 'input window, operand 0']
    #allocation3 [shape = 's32[2]{0}', space=sflag, size = 0x8, scoped, tag = 'scoped memory for tpu_custom_call.1']
    #allocation4 [shape = 's32[2]{0}', space=sflag, size = 0x8, scoped, tag = 'scoped memory for tpu_custom_call.1']
    #allocation5 [shape = 'u8[16384]{0}', space=vmem, size = 0x4000, scoped, tag = 'input window, operand 1, single buffered']
    #allocation6 [shape = 's32[1]{0}', space=sflag, size = 0x4, scoped, tag = 'scoped memory for tpu_custom_call.1']
    #allocation7 [shape = 'u8[1024]{0}', space=vmem, size = 0x400, scoped, tag = 'input window, operand 2, single buffered']
    #allocation8 [shape = 'u8[65536]{0}', space=vmem, size = 0x10000, scoped, tag = 'output window, operand 0']
    %8 = vsyncpa [#allocation3], 0
    %s9 = scalar_lea.sflag [#allocation3], 1
    %10 = vsyncpa %s9, 0
    %11 = vsyncpa [#allocation6], 0
    %12 = vsyncpa [#allocation4], 0
    %s13 = scalar_lea.sflag [#allocation4], 1
    %14 = vsyncpa %s13, 0
    loop: start=0, step=1, limit=4
    $region2: #{tpu_custom_call.1} parent=1 // loop_pre_header
      _
    $region3: #{tpu_custom_call.1} parent=1 // loop_header
      %s16 = sphi 0, %s20
      %p17 = scmp.ge.s32.totalorder %s16, 4
      %s26 = sphi 0, %s28
      %s29 = sphi 0, %s26
      %s30 = sphi 0, %s29
      %s46 = sphi 0, %s30
      %s50 = sphi 0, %s50
      %s52 = sphi 0, %s50
      %s53 = sphi 0, %s52
      %s67 = sphi 0, %s53
      %s71 = sphi 0, %s71
      %s73 = sphi 0, %s71
      %s74 = sphi 0, %s73
      %s88 = sphi 0, %s74
      %s94 = sphi 0, %s96
      %s97 = sphi 0, %s94
      %s98 = sphi 0, %s97
      %s114 = sphi 0, %s98
    $region4: #{tpu_custom_call.1} parent=1 // loop_header_branch
      %19 = sbr.rel (%p17) target = $region8
    $region5: #{tpu_custom_call.1} parent=1 // loop_body
      %s21 = ssub.s32 %s16, 1
      %s22 = ssub.s32 %s16, 2
      %s23 = sadd.s32 %s16, 1
      %s24 = ssub.s32 %s16, %s23
      %p25 = scmp.eq.s32.totalorder %s24, 0
      %s27 = sadd.s32 %s26, 1
      %s28 = scalar_select %p25, %s26, %s27
      %p31 = pneg %p25
      %p32 = scmp.eq.s32.totalorder %s16, 1
      %p33 = por %p31, %p32
      %p34 = scmp.ne.s32.totalorder %s26, %s29
      %p35 = scmp.eq.s32.totalorder %s16, 0
      %p36 = por %p34, %p35
      %p37 = scmp.ne.s32.totalorder %s26, %s29
      %p38 = scmp.eq.s32.totalorder %s21, 1
      %p39 = por %p37, %p38
      %p40 = scmp.ne.s32.totalorder %s29, %s30
      %p41 = scmp.eq.s32.totalorder %s21, 0
      %p42 = por %p40, %p41
      %p43 = scmp.ne.s32.totalorder %s29, %s30
      %p44 = scmp.eq.s32.totalorder %s22, 1
      %p45 = por %p43, %p44
      %p47 = scmp.ne.s32.totalorder %s30, %s46
      %p48 = scmp.eq.s32.totalorder %s22, 0
      %p49 = por %p47, %p48
      %s51 = sadd.s32 %s50, 1
      %p54 = scmp.eq.s32.totalorder %s16, 1
      %p55 = scmp.ne.s32.totalorder %s50, %s52
      %p56 = scmp.eq.s32.totalorder %s16, 0
      %p57 = por %p55, %p56
      %p58 = scmp.ne.s32.totalorder %s50, %s52
      %p59 = scmp.eq.s32.totalorder %s21, 1
      %p60 = por %p58, %p59
      %p61 = scmp.ne.s32.totalorder %s52, %s53
      %p62 = scmp.eq.s32.totalorder %s21, 0
      %p63 = por %p61, %p62
      %p64 = scmp.ne.s32.totalorder %s52, %s53
      %p65 = scmp.eq.s32.totalorder %s22, 1
      %p66 = por %p64, %p65
      %p68 = scmp.ne.s32.totalorder %s53, %s67
      %p69 = scmp.eq.s32.totalorder %s22, 0
      %p70 = por %p68, %p69
      %s72 = sadd.s32 %s71, 1
      %p75 = scmp.eq.s32.totalorder %s16, 1
      %p76 = scmp.ne.s32.totalorder %s71, %s73
      %p77 = scmp.eq.s32.totalorder %s16, 0
      %p78 = por %p76, %p77
      %p79 = scmp.ne.s32.totalorder %s71, %s73
      %p80 = scmp.eq.s32.totalorder %s21, 1
      %p81 = por %p79, %p80
      %p82 = scmp.ne.s32.totalorder %s73, %s74
      %p83 = scmp.eq.s32.totalorder %s21, 0
      %p84 = por %p82, %p83
      %p85 = scmp.ne.s32.totalorder %s73, %s74
      %p86 = scmp.eq.s32.totalorder %s22, 1
      %p87 = por %p85, %p86
      %p89 = scmp.ne.s32.totalorder %s74, %s88
      %p90 = scmp.eq.s32.totalorder %s22, 0
      %p91 = por %p89, %p90
      %s92 = ssub.s32 %s16, %s23
      %p93 = scmp.eq.s32.totalorder %s92, 0
      %s95 = sadd.s32 %s94, 1
      %s96 = scalar_select %p93, %s94, %s95
      %p99 = pneg %p93
      %p100 = scmp.eq.s32.totalorder %s16, 1
      %p101 = por %p99, %p100
      %p102 = scmp.ne.s32.totalorder %s94, %s97
      %p103 = scmp.eq.s32.totalorder %s16, 0
      %p104 = por %p102, %p103
      %p105 = scmp.ne.s32.totalorder %s94, %s97
      %p106 = scmp.eq.s32.totalorder %s21, 1
      %p107 = por %p105, %p106
      %p108 = scmp.ne.s32.totalorder %s97, %s98
      %p109 = scmp.eq.s32.totalorder %s21, 0
      %p110 = por %p108, %p109
      %p111 = scmp.ne.s32.totalorder %s97, %s98
      %p112 = scmp.eq.s32.totalorder %s22, 1
      %p113 = por %p111, %p112
      %p115 = scmp.ne.s32.totalorder %s98, %s114
      %p116 = scmp.eq.s32.totalorder %s22, 0
      %p117 = por %p115, %p116
      %p118 = scmp.le.s32.totalorder 1, %s16
      %p119 = scmp.lt.s32.totalorder %s16, 3
      %p120 = pnand %p118, %p119
      %p121 = pneg %p120
      // Predicated region
      $region9: #{tpu_custom_call.1} parent=5 // pred_check
        _
      $region10: #{tpu_custom_call.1} parent=5 // pred_check_branch
        %123 = sbr.rel (%p120) target = $region12
      $region11: #{tpu_custom_call.1} parent=5 // pred_region
        %s124 = ssub.s32 %s16, 1
        // Predicated region
        $region13: #{tpu_custom_call.1} parent=11 // pred_check
          %p125 = pneg %p63
        $region14: #{tpu_custom_call.1} parent=11 // pred_check_branch
          %127 = sbr.rel (%p125) target = $region16
        $region15: #{tpu_custom_call.1} parent=11 // pred_region
          %129 = vsyncadd [#allocation6], 0
          %s130 = sshll.u32 %s1, 4
          %s131 = int_to_ptr.hbm [resolvable:$true] %s130
          %s132 = sshll.u32 [#allocation5], 4
          %s133 = int_to_ptr.vmem [resolvable:$true] %s132
          %138 = dma.hbm_to_vmem [thread:$0]  %s131, 512, %s133, [#allocation6], 64, 64, 4
        $region16: #{tpu_custom_call.1} parent=11 // pred_fallthru
          _
        // Predicated region
        $region17: #{tpu_custom_call.1} parent=11 // pred_check
          %p139 = pneg %p84
        $region18: #{tpu_custom_call.1} parent=11 // pred_check_branch
          %141 = sbr.rel (%p139) target = $region20
        $region19: #{tpu_custom_call.1} parent=11 // pred_region
          %143 = vsyncadd [#allocation6], 0
          %s145 = sshll.u32 %s2, 4
          %s146 = int_to_ptr.hbm [resolvable:$true] %s145
          %s147 = sshll.u32 [#allocation7], 4
          %s148 = int_to_ptr.vmem [resolvable:$true] %s147
          %150 = dma.hbm_to_vmem [thread:$0]  %s146, 32, %s148, [#allocation6]
        $region20: #{tpu_custom_call.1} parent=11 // pred_fallthru
          _
      $region12: #{tpu_custom_call.1} parent=5 // pred_fallthru
        _
      %p151 = scmp.lt.s32.totalorder %s16, 2
      // Predicated region
      $region21: #{tpu_custom_call.1} parent=5 // pred_check
        %p152 = pneg %p151
      $region22: #{tpu_custom_call.1} parent=5 // pred_check_branch
        %154 = sbr.rel (%p152) target = $region24
      $region23: #{tpu_custom_call.1} parent=5 // pred_region
        // Predicated region
        $region25: #{tpu_custom_call.1} parent=23 // pred_check
          %p155 = pneg %p36
        $region26: #{tpu_custom_call.1} parent=23 // pred_check_branch
          %157 = sbr.rel (%p155) target = $region28
        $region27: #{tpu_custom_call.1} parent=23 // pred_region
          %s158 = sand.u32 %s26, 1
          %s159 = scalar_lea.sflag [#allocation3], %s158
          %s160 = sand.u32 %s26, 1
          %s161 = smul.addr %s160, 64
          %s162 = scalar_lea.vmem [#allocation2], %s161
          %164 = vsyncadd %s159, 0
          %s165 = smul.addr %s16, 8
          %s166 = smul.addr %s165, 8
          %s167 = scalar_lea.hbm %s0, %s166
          %s168 = sshll.u32 %s167, 4
          %s169 = int_to_ptr.hbm [resolvable:$true] %s168
          %s170 = sshll.u32 %s162, 4
          %s171 = int_to_ptr.vmem [resolvable:$true] %s170
          %176 = dma.hbm_to_vmem [thread:$0]  %s169, 1024, %s171, %s159, 128, 128, 8
        $region28: #{tpu_custom_call.1} parent=23 // pred_fallthru
          _
      $region24: #{tpu_custom_call.1} parent=5 // pred_fallthru
        _
      %p177 = scmp.le.s32.totalorder 1, %s16
      %p178 = scmp.lt.s32.totalorder %s16, 3
      %p179 = pnand %p177, %p178
      %p180 = pneg %p179
      // Predicated region
      $region29: #{tpu_custom_call.1} parent=5 // pred_check
        _
      $region30: #{tpu_custom_call.1} parent=5 // pred_check_branch
        %182 = sbr.rel (%p179) target = $region32
      $region31: #{tpu_custom_call.1} parent=5 // pred_region
        %s183 = ssub.s32 %s16, 1
        %s184 = sand.u32 %s29, 1
        %s185 = scalar_lea.sflag [#allocation3], %s184
        %s186 = sand.u32 %s29, 1
        %s187 = smul.addr %s186, 64
        %s188 = scalar_lea.vmem [#allocation2], %s187
        // Predicated region
        $region33: #{tpu_custom_call.1} parent=31 // pred_check
          %p189 = pneg %p42
        $region34: #{tpu_custom_call.1} parent=31 // pred_check_branch
          %191 = sbr.rel (%p189) target = $region36
        $region35: #{tpu_custom_call.1} parent=31 // pred_region
          %193 = dma.done %s185, 1024
        $region36: #{tpu_custom_call.1} parent=31 // pred_fallthru
          _
        // Predicated region
        $region37: #{tpu_custom_call.1} parent=31 // pred_check
          %p194 = pneg %p63
        $region38: #{tpu_custom_call.1} parent=31 // pred_check_branch
          %196 = sbr.rel (%p194) target = $region40
        $region39: #{tpu_custom_call.1} parent=31 // pred_region
          %198 = dma.done [#allocation6], 512
        $region40: #{tpu_custom_call.1} parent=31 // pred_fallthru
          _
        // Predicated region
        $region41: #{tpu_custom_call.1} parent=31 // pred_check
          %p199 = pneg %p84
        $region42: #{tpu_custom_call.1} parent=31 // pred_check_branch
          %201 = sbr.rel (%p199) target = $region44
        $region43: #{tpu_custom_call.1} parent=31 // pred_region
          %203 = dma.done [#allocation6], 32
        $region44: #{tpu_custom_call.1} parent=31 // pred_fallthru
          _
        %s204 = sand.u32 %s29, 1
        %s205 = scalar_lea.sflag [#allocation3], %s204
        %s206 = sand.u32 %s29, 1
        %s207 = smul.addr %s206, 64
        %s208 = scalar_lea.vmem [#allocation2], %s207
        %p209 = pneg %p42
        %p210 = pneg %p39
        %p211 = pneg %p63
        %p212 = pneg %p60
        %p213 = pneg %p84
        %p214 = pneg %p81
        %p215 = pneg %p110
        %p216 = pneg %p107
        %s217 = sand.u32 %s97, 1
        %s218 = scalar_lea.sflag [#allocation4], %s217
        %s219 = sand.u32 %s97, 1
        %s220 = smul.addr %s219, 64
        %s221 = scalar_lea.vmem [#allocation8], %s220
        %v223 = vld [vmem:[#allocation5] sm:$0xf]
        %v224 = vld [vmem:[#allocation5 + $0x4] sm:$0xf]
        %v225 = vld [vmem:[#allocation5 + $0x8] sm:$0xf]
        %v226 = vld [vmem:[#allocation5 + $0xc] sm:$0xf]
        %v227 = vld [vmem:[#allocation5 + $0x10] sm:$0xf]
        %v228 = vld [vmem:[#allocation5 + $0x14] sm:$0xf]
        %v229 = vld [vmem:[#allocation5 + $0x18] sm:$0xf]
        %v230 = vld [vmem:[#allocation5 + $0x1c] sm:$0xf]
        %v231 = vld [vmem:[%s188] sm:$0xff]
        %v232 = vld [vmem:[%s188 + $0x8] sm:$0xff]
        %v233 = vld [vmem:[%s188 + $0x10] sm:$0xff]
        %v234 = vld [vmem:[%s188 + $0x18] sm:$0xff]
        %v235 = vld [vmem:[%s188 + $0x20] sm:$0xff]
        %v236 = vld [vmem:[%s188 + $0x28] sm:$0xff]
        %v237 = vld [vmem:[%s188 + $0x30] sm:$0xff]
        %v238 = vld [vmem:[%s188 + $0x38] sm:$0xff]
        %v239 = vld [vmem:[#allocation7] sm:$0x1]
        %v240 = vperm.slane %v239, 0
        %v241 = vmul.f32 %v231, %v240
        %v242 = vmul.f32 %v232, %v240
        %v243 = vmul.f32 %v233, %v240
        %v244 = vmul.f32 %v234, %v240
        %v245 = vmul.f32 %v235, %v240
        %v246 = vmul.f32 %v236, %v240
        %v247 = vmul.f32 %v237, %v240
        %v248 = vmul.f32 %v238, %v240
        %v249 = vld [vmem:[#allocation7 + $0x1] sm:$0x1]
        %v250 = vperm.slane %v249, 0
        %v251 = vmul.f32 %v231, %v250
        %v252 = vmul.f32 %v232, %v250
        %v253 = vmul.f32 %v233, %v250
        %v254 = vmul.f32 %v234, %v250
        %v255 = vmul.f32 %v235, %v250
        %v256 = vmul.f32 %v236, %v250
        %v257 = vmul.f32 %v237, %v250
        %v258 = vmul.f32 %v238, %v250
        %v259 = vpack.c.bf16 %v252, %v251
        %v260 = vpack.c.bf16 %v254, %v253
        %v261 = vpack.c.bf16 %v256, %v255
        %v262 = vpack.c.bf16 %v258, %v257
        %v271 = vunpack.c.l.b16 %v223
        %v272 = vunpack.c.l.b16 %v224
        %v273 = vunpack.c.l.b16 %v225
        %v274 = vunpack.c.l.b16 %v226
        %v275 = vunpack.c.l.b16 %v227
        %v276 = vunpack.c.l.b16 %v228
        %v277 = vunpack.c.l.b16 %v229
        %v278 = vunpack.c.l.b16 %v230
        %v279 = vpack.c.b16 %v272, %v271
        %v280 = vpack.c.b16 %v274, %v273
        %v281 = vpack.c.b16 %v276, %v275
        %v282 = vpack.c.b16 %v278, %v277
        %vm283 = vcmask 523264
        %v285 = vsel %vm283, %v279, 0
        %v288 = vsel %vm283, %v280, 0
        %v291 = vsel %vm283, %v281, 0
        %v294 = vsel %vm283, %v282, 0
        %296 = vmatpush.bf16.msra.mxu0 0
        %297 = vmatpush.bf16.msra.mxu0 0
        %298 = vmatpush.bf16.msra.mxu0 0
        %299 = vmatpush.bf16.msra.mxu0 0
        %300 = vmatpush.bf16.msra.mxu0 %v262
        %301 = vmatpush.bf16.msra.mxu0 %v261
        %302 = vmatpush.bf16.msra.mxu0 %v260
        %303 = vmatpush.bf16.msra.mxu0 %v259
        %304 = vmatmul.bf16.gmra.mxu0 %v285
        %v305 = vpop.f32.mrf.mxu0
        %v306 = vadd.f32 0.0, %v305
        %v307 = vpop.f32.mrf.mxu0
        %v308 = vadd.f32 0.0, %v307
        %309 = vmatmul.bf16.gmra.mxu0 %v288
        %v310 = vpop.f32.mrf.mxu0
        %v311 = vadd.f32 0.0, %v310
        %v312 = vpop.f32.mrf.mxu0
        %v313 = vadd.f32 0.0, %v312
        %314 = vmatmul.bf16.gmra.mxu0 %v291
        %v315 = vpop.f32.mrf.mxu0
        %v316 = vadd.f32 0.0, %v315
        %v317 = vpop.f32.mrf.mxu0
        %v318 = vadd.f32 0.0, %v317
        %319 = vmatmul.bf16.gmra.mxu0 %v294
        %v320 = vpop.f32.mrf.mxu0
        %v321 = vadd.f32 0.0, %v320
        %v322 = vpop.f32.mrf.mxu0
        %v323 = vadd.f32 0.0, %v322
        %324 = vdwg.mxu0
        %v325 = vadd.f32 %v241, %v306
        %v326 = vadd.f32 %v242, %v308
        %v327 = vadd.f32 %v243, %v311
        %v328 = vadd.f32 %v244, %v313
        %v329 = vadd.f32 %v245, %v316
        %v330 = vadd.f32 %v246, %v318
        %v331 = vadd.f32 %v247, %v321
        %v332 = vadd.f32 %v248, %v323
        %333 = vst [vmem:[%s221] sm:$0xff] %v325
        %334 = vst [vmem:[%s221 + $0x8] sm:$0xff] %v326
        %335 = vst [vmem:[%s221 + $0x10] sm:$0xff] %v327
        %336 = vst [vmem:[%s221 + $0x18] sm:$0xff] %v328
        %337 = vst [vmem:[%s221 + $0x20] sm:$0xff] %v329
        %338 = vst [vmem:[%s221 + $0x28] sm:$0xff] %v330
        %339 = vst [vmem:[%s221 + $0x30] sm:$0xff] %v331
        %340 = vst [vmem:[%s221 + $0x38] sm:$0xff] %v332
        %s341 = sand.u32 %s97, 1
        %s342 = scalar_lea.sflag [#allocation4], %s341
        %s343 = sand.u32 %s97, 1
        %s344 = smul.addr %s343, 64
        %s345 = scalar_lea.vmem [#allocation8], %s344
        // Predicated region
        $region45: #{tpu_custom_call.1} parent=31 // pred_check
          %p346 = pneg %p107
        $region46: #{tpu_custom_call.1} parent=31 // pred_check_branch
          %348 = sbr.rel (%p346) target = $region48
        $region47: #{tpu_custom_call.1} parent=31 // pred_region
          %350 = vsyncadd %s342, 0
          %s351 = smul.addr %s21, 8
          %s352 = smul.addr %s351, 8
          %s353 = scalar_lea.hbm %s3, %s352
          %s354 = sshll.u32 %s345, 4
          %s355 = int_to_ptr.vmem [resolvable:$true] %s354
          %s356 = sshll.u32 %s353, 4
          %s357 = int_to_ptr.hbm [resolvable:$true] %s356
          %362 = dma.vmem_to_hbm [thread:$0]  %s355, 1024, %s357, %s342, 128, 128, 8
        $region48: #{tpu_custom_call.1} parent=31 // pred_fallthru
          _
      $region32: #{tpu_custom_call.1} parent=5 // pred_fallthru
        _
      %p363 = scmp.le.s32.totalorder 2, %s16
      // Predicated region
      $region49: #{tpu_custom_call.1} parent=5 // pred_check
        %p364 = pneg %p363
      $region50: #{tpu_custom_call.1} parent=5 // pred_check_branch
        %366 = sbr.rel (%p364) target = $region52
      $region51: #{tpu_custom_call.1} parent=5 // pred_region
        %s367 = ssub.s32 %s16, 2
        // Predicated region
        $region53: #{tpu_custom_call.1} parent=51 // pred_check
          %p368 = pneg %p113
        $region54: #{tpu_custom_call.1} parent=51 // pred_check_branch
          %370 = sbr.rel (%p368) target = $region56
        $region55: #{tpu_custom_call.1} parent=51 // pred_region
          %s371 = sand.u32 %s98, 1
          %s372 = scalar_lea.sflag [#allocation4], %s371
          %s373 = sand.u32 %s98, 1
          %s374 = smul.addr %s373, 64
          %s375 = scalar_lea.vmem [#allocation8], %s374
          %377 = dma.done %s372, 1024
        $region56: #{tpu_custom_call.1} parent=51 // pred_fallthru
          _
      $region52: #{tpu_custom_call.1} parent=5 // pred_fallthru
        _
    $region6: #{tpu_custom_call.1} parent=1 // loop_footer
      %s20 = sadd.s32 1, %s16
    $region7: #{tpu_custom_call.1} parent=1 // loop_footer_branch
      %15 = sbr.rel target = $region3
    $region8: #{tpu_custom_call.1} parent=1 // loop_exit
      _
    %378 = vsyncpa [#allocation3], 1
    %s379 = scalar_lea.sflag [#allocation3], 1
    %380 = vsyncpa %s379, 1
    %381 = vsyncpa [#allocation6], 1
    %382 = vsyncpa [#allocation4], 1
    %s383 = scalar_lea.sflag [#allocation4], 1
    %384 = vsyncpa %s383, 1

</llo_original>
